<compile_context>
chip_gen: v6e
topology: v6e:2x2x1
jax: 0.10.0
libtpu: 0.0.40
codegen_flags: <defaults>
</compile_context>

<pallas_src>
import functools

import jax
import jax.numpy as jnp
from jax.experimental import pallas as pl
from jax.experimental.pallas import tpu as pltpu


# ----------------------------- small helpers -----------------------------
def _sigmoid(y):
    # Equivalent to jax.nn.sigmoid; written explicitly so it lowers to exp + divide.
    return 1.0 / (1.0 + jnp.exp(-y))


def _vmem_capacity_bytes():
    try:
        info = pltpu.get_tpu_info()
        cap = int(getattr(info, "vmem_capacity_bytes", 0) or 0)
        if cap > 0:
            return cap
    except Exception:
        pass
    return 64 << 20  # conservative default: v7x per-TensorCore VMEM


def _fold_lanes(x, op, acc_w):
    """Reduce (C, W) -> (C, acc_w) along lanes with pure elementwise (VPU) ops.

    Requires W == acc_w * 2**k (the tile picker guarantees it); every slice point is a
    multiple of 128, so no relayout and no per-tile XLU cross-lane work is generated.
    """
    w = x.shape[-1]
    while w > acc_w:
        h = w // 2
        x = op(x[:, :h], x[:, h:w])
        w = h
    return x


def _accumulate_tile(x_ref, max_acc, sum_acc, *, ts, acc_w, hw, tile_idx, need_mask,
                     is_first):
    """Fold one (1, C, TS) activation tile into the running per-channel max / sum."""

    @pl.when(is_first)
    def _():
        max_acc[...] = jnp.full_like(max_acc, -jnp.inf)
        sum_acc[...] = jnp.zeros_like(sum_acc)

    # Native-dtype tile on the HBM wire; the f32 upcast is VPU work hidden under the DMA.
    x = x_ref[0].astype(jnp.float32)                                   # (C, TS)

    def update(mask):
        xm = x if mask is None else jnp.where(mask, x, -jnp.inf)
        xs = x if mask is None else jnp.where(mask, x, 0.0)
        max_acc[...] = jnp.maximum(max_acc[...], _fold_lanes(xm, jnp.maximum, acc_w))
        sum_acc[...] = sum_acc[...] + _fold_lanes(xs, jnp.add, acc_w)

    if need_mask:
        base = tile_idx * ts
        full = (base + ts) <= hw            # is this tile fully inside the valid H*W range?

        @pl.when(full)
        def _():
            update(None)                    # fast path: no select cost for interior tiles

        @pl.when(jnp.logical_not(full))
        def _():
            lane = jax.lax.broadcasted_iota(jnp.int32, (1, ts), 1)
            update((base + lane) < hw)      # partial / duplicated tail tile
    else:
        update(None)


# ----------------------------- Pallas kernels -----------------------------
def _ca_fused_kernel(x_ref, w1_ref, w2_ref, out_ref, max_acc, sum_acc, *,
                     ts, acc_w, hw, need_mask, use_mxu):
    # x_ref  : (1, C, TS)  activation tile (channels on sublanes, spatial on lanes)
    # w1_ref : (Cr, C) if use_mxu else (C, Cr)   fc1 weight
    # w2_ref : (C, Cr)                           fc2 weight (PyTorch layout)
    # out_ref: (1, C, 1)   sigmoid(fc(maxpool) + fc(avgpool))
    s = pl.program_id(1)
    _accumulate_tile(x_ref, max_acc, sum_acc, ts=ts, acc_w=acc_w, hw=hw,
                     tile_idx=s, need_mask=need_mask, is_first=(s == 0))

    @pl.when(s == pl.num_programs(1) - 1)
    def _():
        p_max = jnp.max(max_acc[...], axis=1, keepdims=True)               # (C, 1)
        p_avg = jnp.sum(sum_acc[...], axis=1, keepdims=True) / float(hw)   # (C, 1)
        if use_mxu:
            # Large C*Cr: keep the epilogue contractions on the MXU so they stay hidden.
            p = jnp.concatenate([p_max, p_avg], axis=1)                    # (C, 2)
            h = jnp.maximum(
                jnp.dot(w1_ref[...], p, precision=jax.lax.Precision.HIGHEST,
                        preferred_element_type=jnp.float32), 0.0)          # (Cr, 2)
            hsum = h[:, 0:1] + h[:, 1:2]                                   # fc2 is linear
            y = jnp.dot(w2_ref[...], hsum, precision=jax.lax.Precision.HIGHEST,
                        preferred_element_type=jnp.float32)                # (C, 1)
        else:
            # Small C*Cr: exact f32 broadcast-multiply-reduce on the VPU.
            w1t = w1_ref[...]                                              # (C, Cr)
            h_max = jnp.sum(w1t * p_max, axis=0, keepdims=True)            # (1, Cr)
            h_avg = jnp.sum(w1t * p_avg, axis=0, keepdims=True)            # (1, Cr)
            h = jnp.maximum(h_max, 0.0) + jnp.maximum(h_avg, 0.0)          # ReLU then sum
            y = jnp.sum(w2_ref[...] * h, axis=1, keepdims=True)            # (C, 1)
        out_ref[0] = _sigmoid(y)


def _ca_partial_kernel(x_ref, pmax_ref, psum_ref, max_acc, sum_acc, *,
                       ts, acc_w, hw, n_per, need_mask):
    # Per-(batch, chunk) partial pooling, so the spatial reduction can be sharded across
    # both v7x TensorCores even when B == 1.
    c = pl.program_id(1)
    s = pl.program_id(2)
    _accumulate_tile(x_ref, max_acc, sum_acc, ts=ts, acc_w=acc_w, hw=hw,
                     tile_idx=c * n_per + s, need_mask=need_mask, is_first=(s == 0))

    @pl.when(s == pl.num_programs(2) - 1)
    def _():
        pmax_ref[0, 0] = jnp.max(max_acc[...], axis=1, keepdims=True)      # (C, 1)
        psum_ref[0, 0] = jnp.sum(sum_acc[...], axis=1, keepdims=True)      # (C, 1)


# ----------------------------- wrapper -----------------------------
def _pick_spatial_tile(hw, c, itemsize, target_bytes):
    """Spatial tile (lanes): full HW when HW < 128, else 128 * 2**k lanes under target_bytes."""
    if hw < 128:
        return hw
    max_lanes = max(128, min(hw, target_bytes // max(1, c * itemsize)))
    ts = 128
    while ts * 2 <= max_lanes:
        ts *= 2
    return ts


def channel_attention_forward(x_nchw, w_fc1, w_fc2, *, spatial_tile=None,
                              split_spatial=None):
    """ChannelAttentionModule forward.

    x_nchw: (B, C, H, W), any float dtype (streamed in native precision; a contiguous NCHW
            layout is expected so the (B, C, H*W) view is a free reshape).
    w_fc1 : (C//r, C)  PyTorch conv1x1 weight (squeezed), fc1: C -> C//r
    w_fc2 : (C, C//r)  PyTorch conv1x1 weight (squeezed), fc2: C//r -> C
    Returns (B, C, 1, 1) float32 attention gate.
    """
    B, C, H, W = x_nchw.shape
    Cr = w_fc1.shape[0]
    assert w_fc1.shape == (Cr, C) and w_fc2.shape == (C, Cr)
    HW = H * W
    itemsize = jnp.dtype(x_nchw.dtype).itemsize

    # ---- chip-aware VMEM budget: x double-buffered, weights double-buffered (constant-index
    # blocks, accounted explicitly), plus accumulator scratch + margin.
    budget = (_vmem_capacity_bytes() * 3) // 4
    w_bufs_bytes = 2 * 2 * C * Cr * 4          # 2 weights x 2 pipeline buffers, f32
    scratch_est = 2 * C * 128 * 4
    spare = budget - w_bufs_bytes - scratch_est - (2 << 20)
    target_tile_bytes = int(min(16 << 20, max(1 << 20, spare // 2)))

    TS = (_pick_spatial_tile(HW, C, itemsize, target_tile_bytes)
          if spatial_tile is None else int(spatial_tile))
    assert TS <= HW and (TS % 128 == 0 or TS == HW), (HW, TS)
    n_tiles = -(-HW // TS)

    # Accumulator width: one vreg of lanes when TS = 128 * 2**k (pairwise lane folding),
    # otherwise the full tile width (still purely elementwise accumulation).
    nfold = TS // 128 if TS % 128 == 0 else 0
    acc_w = 128 if (nfold >= 1 and (nfold & (nfold - 1)) == 0) else TS

    x = x_nchw.reshape(B, C, HW)               # free view of contiguous NCHW, native dtype
    w2k = jnp.asarray(w_fc2, jnp.float32)      # (C, Cr)

    if split_spatial is None:
        # With only the batch axis "parallel", B == 1 would leave one v7x TensorCore idle.
        split_spatial = (B == 1 and n_tiles >= 2)

    if not split_spatial:
        # ---------------- fused single-kernel path ----------------
        use_mxu = (C * Cr) >= 4096             # epilogue contractions on the MXU for large C
        w1k = (jnp.asarray(w_fc1, jnp.float32) if use_mxu
               else jnp.asarray(w_fc1, jnp.float32).T)        # (Cr, C) or (C, Cr)
        need_mask = (HW % TS) != 0

        x_block_bytes = C * TS * itemsize
        vmem_need = 2 * x_block_bytes + w_bufs_bytes + 2 * C * acc_w * 4 + (2 << 20)
        vmem_limit = int(min(max(vmem_need, 8 << 20), budget))

        kernel = functools.partial(_ca_fused_kernel, ts=TS, acc_w=acc_w, hw=HW,
                                   need_mask=need_mask, use_mxu=use_mxu)
        out = pl.pallas_call(
            kernel,
            out_shape=jax.ShapeDtypeStruct((B, C, 1), jnp.float32),
            grid_spec=pltpu.PrefetchScalarGridSpec(
                num_scalar_prefetch=0,
                grid=(B, n_tiles),
                in_specs=[
                    pl.BlockSpec((1, C, TS), lambda b, s: (b, 0, s)),
                    # Constant-index weight blocks (fetched once, reused every step).
                    # TODO(synk): pipeline_mode=pl.Buffered(1) would halve their VMEM
                    # footprint; left at the default buffering for portability.
                    pl.BlockSpec(w1k.shape, lambda b, s: (0, 0)),
                    pl.BlockSpec((C, Cr), lambda b, s: (0, 0)),
                ],
                out_specs=pl.BlockSpec((1, C, 1), lambda b, s: (b, 0, 0)),
                scratch_shapes=[pltpu.VMEM((C, acc_w), jnp.float32),
                                pltpu.VMEM((C, acc_w), jnp.float32)],
            ),
            compiler_params=pltpu.CompilerParams(
                dimension_semantics=("parallel", "arbitrary"),
                vmem_limit_bytes=vmem_limit,
            ),
        )(x, w1k, w2k)
        return out.reshape(B, C, 1, 1)

    # -------- small-batch path: spatial-parallel partial pooling + tiny JAX combine --------
    n_chunks = 2
    n_per = -(-n_tiles // n_chunks)
    need_mask = (HW % TS != 0) or (n_chunks * n_per != n_tiles)

    x_block_bytes = C * TS * itemsize
    vmem_need = 2 * x_block_bytes + 2 * C * acc_w * 4 + (2 << 20)
    vmem_limit = int(min(max(vmem_need, 8 << 20), budget))

    kernel = functools.partial(_ca_partial_kernel, ts=TS, acc_w=acc_w, hw=HW,
                               n_per=n_per, need_mask=need_mask)
    pmax, psum = pl.pallas_call(
        kernel,
        out_shape=(jax.ShapeDtypeStruct((B, n_chunks, C, 1), jnp.float32),
                   jax.ShapeDtypeStruct((B, n_chunks, C, 1), jnp.float32)),
        grid_spec=pltpu.PrefetchScalarGridSpec(
            num_scalar_prefetch=0,
            grid=(B, n_chunks, n_per),
            in_specs=[pl.BlockSpec(
                (1, C, TS),
                # Clamp keeps the DMA in-bounds for the ragged tail; the lane mask inside
                # the kernel zeroes the duplicated tile's contribution.
                lambda b, c, s: (b, 0, jnp.minimum(c * n_per + s, n_tiles - 1)))],
            out_specs=[pl.BlockSpec((1, 1, C, 1), lambda b, c, s: (b, c, 0, 0)),
                       pl.BlockSpec((1, 1, C, 1), lambda b, c, s: (b, c, 0, 0))],
            scratch_shapes=[pltpu.VMEM((C, acc_w), jnp.float32),
                            pltpu.VMEM((C, acc_w), jnp.float32)],
        ),
        compiler_params=pltpu.CompilerParams(
            dimension_semantics=("parallel", "parallel", "arbitrary"),
            vmem_limit_bytes=vmem_limit,
        ),
    )(x)

    # Tiny (B, C) combine + FC + sigmoid: negligible next to the streaming pass.
    xmax = jnp.max(pmax[..., 0], axis=1)                      # (B, C)
    xavg = jnp.sum(psum[..., 0], axis=1) / float(HW)          # (B, C)
    w1 = jnp.asarray(w_fc1, jnp.float32)

    def fc(v):
        h = jnp.maximum(jnp.einsum('rc,bc->br', w1, v,
                                   precision=jax.lax.Precision.HIGHEST), 0.0)
        return jnp.einsum('cr,br->bc', w2k, h, precision=jax.lax.Precision.HIGHEST)

    y = _sigmoid(fc(xmax) + fc(xavg))
    return y.reshape(B, C, 1, 1)


# ---------------- parameter setup (deterministic, matches PyTorch init) ----------------
def kaiming_conv1x1(key, out_c, in_c):
    # kaiming_normal_(mode='fan_in', nonlinearity='relu'): std = sqrt(2 / fan_in)
    std = (2.0 / in_c) ** 0.5
    return std * jax.random.normal(key, (out_c, in_c), jnp.float32)


def make_params(channels, reduction, key):
    k1, k2 = jax.random.split(key)
    w_fc1 = kaiming_conv1x1(k1, channels // reduction, channels)   # (Cr, C)
    w_fc2 = kaiming_conv1x1(k2, channels, channels // reduction)   # (C, Cr)
    return w_fc1, w_fc2


# ---------------- plain-JAX reference (sanity check) ----------------
def channel_attention_ref(x_nchw, w_fc1, w_fc2):
    B, C, H, W = x_nchw.shape
    xf = x_nchw.astype(jnp.float32)
    xmax = jnp.max(xf, axis=(2, 3))     # AdaptiveMaxPool2d(1) -> (B, C)
    xavg = jnp.mean(xf, axis=(2, 3))    # AdaptiveAvgPool2d(1) -> (B, C)

    def fc(v):
        h = jnp.maximum(jnp.einsum('rc,bc->br', w_fc1, v,
                                   precision=jax.lax.Precision.HIGHEST), 0.0)
        return jnp.einsum('cr,br->bc', w_fc2, h, precision=jax.lax.Precision.HIGHEST)

    y = jax.nn.sigmoid(fc(xmax) + fc(xavg))
    return y.reshape(B, C, 1, 1)


if __name__ == "__main__":
    key = jax.random.PRNGKey(0)
    kx1, kx2, kx3, kx4, kp1, kp2, kp3, kp4 = jax.random.split(key, 8)

    # Case 1: fused path, 128-aligned spatial, auto tile (single tile of 256 lanes).
    B, C, H, W, red = 2, 32, 16, 16, 8
    w1, w2 = make_params(C, red, kp1)
    x = jax.random.normal(kx1, (B, C, H, W), jnp.float32)
    out1 = jax.jit(channel_attention_forward)(x, w1, w2)
    ref1 = channel_attention_ref(x, w1, w2)
    assert out1.shape == (B, C, 1, 1)
    assert jnp.allclose(out1, ref1, atol=1e-5, rtol=1e-5), "case1 mismatch"

    # Case 2: bf16 activations streamed natively + forced 128-lane tile => multi-step accum.
    xb = x.astype(jnp.bfloat16)
    out2 = jax.jit(functools.partial(channel_attention_forward, spatial_tile=128))(xb, w1, w2)
    ref2 = channel_attention_ref(xb, w1, w2)
    assert jnp.allclose(out2, ref2, atol=1e-4, rtol=1e-4), "case2 (bf16) mismatch"

    # Case 3: B=1 => spatial-split two-TensorCore path; HW=324 (not a multiple of 128)
    #         => masked partial tile + clamped duplicated tail tile in the ragged chunk.
    B3, C3, H3, W3, red3 = 1, 32, 18, 18, 4
    w1c, w2c = make_params(C3, red3, kp2)
    x3 = jax.random.normal(kx2, (B3, C3, H3, W3), jnp.float32)
    out3 = jax.jit(functools.partial(channel_attention_forward, spatial_tile=128))(x3, w1c, w2c)
    ref3 = channel_attention_ref(x3, w1c, w2c)
    assert jnp.allclose(out3, ref3, atol=1e-5, rtol=1e-5), "case3 (split) mismatch"

    # Case 4: HW < 128 (10x10): single full-extent tile, fused path.
    B4, C4, H4, W4, red4 = 2, 16, 10, 10, 8
    w1d, w2d = make_params(C4, red4, kp3)
    x4 = jax.random.normal(kx3, (B4, C4, H4, W4), jnp.float32)
    out4 = jax.jit(channel_attention_forward)(x4, w1d, w2d)
    ref4 = channel_attention_ref(x4, w1d, w2d)
    assert jnp.allclose(out4, ref4, atol=1e-5, rtol=1e-5), "case4 (HW<128) mismatch"

    # Case 5: fused path with a masked last tile (B=2, HW=324, forced 128-lane tile).
    B5, C5, H5, W5, red5 = 2, 8, 18, 18, 2
    w1e, w2e = make_params(C5, red5, kp4)
    x5 = jax.random.normal(kx4, (B5, C5, H5, W5), jnp.float32)
    out5 = jax.jit(functools.partial(channel_attention_forward, spatial_tile=128))(x5, w1e, w2e)
    ref5 = channel_attention_ref(x5, w1e, w2e)
    assert jnp.allclose(out5, ref5, atol=1e-5, rtol=1e-5), "case5 (masked fused) mismatch"

    jax.block_until_ready((out1, out2, out3, out4, out5))
    print("KERNEL_OK")
</pallas_src>

<mosaic_0001>
module attributes {stable_mosaic.version = 11 : i64} {
  func.func @_ca_fused_kernel(%arg0: i32, %arg1: i32, %arg2: memref<1x32x256xf32, #tpu.memory_space<vmem>>, %arg3: memref<32x4xf32, #tpu.memory_space<vmem>>, %arg4: memref<32x4xf32, #tpu.memory_space<vmem>>, %arg5: memref<1x32x1xf32, #tpu.memory_space<vmem>>, %arg6: memref<32x128xf32, #tpu.memory_space<vmem>>, %arg7: memref<32x128xf32, #tpu.memory_space<vmem>>) attributes {dimension_semantics = [#tpu.dimension_semantics<parallel>, #tpu.dimension_semantics<arbitrary>], iteration_bounds = array<i64: 2, 1>, scalar_prefetch = 0 : i64, scratch_operands = 2 : i64, tpu.core_type = #tpu.core_type<tc>, window_params = [{transform_indices = @transform_0, window_bounds = array<i64: 1, 32, 256>}, {pipeline_mode = #tpu.pipeline_mode<synchronous>, transform_indices = @transform_1, window_bounds = array<i64: 32, 4>}, {pipeline_mode = #tpu.pipeline_mode<synchronous>, transform_indices = @transform_2, window_bounds = array<i64: 32, 4>}, {transform_indices = @transform_3, window_bounds = array<i64: 1, 32, 1>}]} {
    %c0_i32 = arith.constant 0 : i32
    %0 = arith.cmpi eq, %arg1, %c0_i32 : i32
    %1 = arith.extui %0 : i1 to i32
    %c0_i32_0 = arith.constant 0 : i32
    %2 = arith.cmpi ne, %1, %c0_i32_0 : i32
    scf.if %2 {
      %cst = arith.constant 0xFF800000 : f32
      %20 = vector.broadcast %cst : f32 to vector<32x128xf32>
      %c0_13 = arith.constant 0 : index
      %c0_14 = arith.constant 0 : index
      %21 = vector.load %arg6[%c0_13, %c0_14] : memref<32x128xf32, #tpu.memory_space<vmem>>, vector<32x128xf32>
      tpu.vector_store %arg6[%c0_13, %c0_14], %20 {strides = array<i32>} : memref<32x128xf32, #tpu.memory_space<vmem>>, vector<32x128xf32>,
      %cst_15 = arith.constant 0.000000e+00 : f32
      %22 = vector.broadcast %cst_15 : f32 to vector<32x128xf32>
      %c0_16 = arith.constant 0 : index
      %c0_17 = arith.constant 0 : index
      %23 = vector.load %arg7[%c0_16, %c0_17] : memref<32x128xf32, #tpu.memory_space<vmem>>, vector<32x128xf32>
      tpu.vector_store %arg7[%c0_16, %c0_17], %22 {strides = array<i32>} : memref<32x128xf32, #tpu.memory_space<vmem>>, vector<32x128xf32>,
    } else {
    }
    %c0 = arith.constant 0 : index
    %c0_1 = arith.constant 0 : index
    %c0_2 = arith.constant 0 : index
    %3 = vector.load %arg2[%c0, %c0_1, %c0_2] : memref<1x32x256xf32, #tpu.memory_space<vmem>>, vector<1x32x256xf32>
    %4 = vector.shape_cast %3 : vector<1x32x256xf32> to vector<32x256xf32>
    %c0_3 = arith.constant 0 : index
    %c0_4 = arith.constant 0 : index
    %5 = vector.load %arg6[%c0_3, %c0_4] : memref<32x128xf32, #tpu.memory_space<vmem>>, vector<32x128xf32>
    %6 = vector.extract_strided_slice %4 {offsets = [0, 0], sizes = [32, 128], strides = [1, 1]} : vector<32x256xf32> to vector<32x128xf32>
    %7 = vector.extract_strided_slice %4 {offsets = [0, 128], sizes = [32, 128], strides = [1, 1]} : vector<32x256xf32> to vector<32x128xf32>
    %8 = arith.maximumf %6, %7 : vector<32x128xf32>
    %9 = arith.maximumf %5, %8 : vector<32x128xf32>
    %c0_5 = arith.constant 0 : index
    %c0_6 = arith.constant 0 : index
    %10 = vector.load %arg6[%c0_5, %c0_6] : memref<32x128xf32, #tpu.memory_space<vmem>>, vector<32x128xf32>
    tpu.vector_store %arg6[%c0_5, %c0_6], %9 {strides = array<i32>} : memref<32x128xf32, #tpu.memory_space<vmem>>, vector<32x128xf32>,
    %c0_7 = arith.constant 0 : index
    %c0_8 = arith.constant 0 : index
    %11 = vector.load %arg7[%c0_7, %c0_8] : memref<32x128xf32, #tpu.memory_space<vmem>>, vector<32x128xf32>
    %12 = vector.extract_strided_slice %4 {offsets = [0, 0], sizes = [32, 128], strides = [1, 1]} : vector<32x256xf32> to vector<32x128xf32>
    %13 = vector.extract_strided_slice %4 {offsets = [0, 128], sizes = [32, 128], strides = [1, 1]} : vector<32x256xf32> to vector<32x128xf32>
    %14 = arith.addf %12, %13 : vector<32x128xf32>
    %15 = arith.addf %11, %14 : vector<32x128xf32>
    %c0_9 = arith.constant 0 : index
    %c0_10 = arith.constant 0 : index
    %16 = vector.load %arg7[%c0_9, %c0_10] : memref<32x128xf32, #tpu.memory_space<vmem>>, vector<32x128xf32>
    tpu.vector_store %arg7[%c0_9, %c0_10], %15 {strides = array<i32>} : memref<32x128xf32, #tpu.memory_space<vmem>>, vector<32x128xf32>,
    %c0_i32_11 = arith.constant 0 : i32
    %17 = arith.cmpi eq, %arg1, %c0_i32_11 : i32
    %18 = arith.extui %17 : i1 to i32
    %c0_i32_12 = arith.constant 0 : i32
    %19 = arith.cmpi ne, %18, %c0_i32_12 : i32
    scf.if %19 {
      %c0_13 = arith.constant 0 : index
      %c0_14 = arith.constant 0 : index
      %20 = vector.load %arg6[%c0_13, %c0_14] : memref<32x128xf32, #tpu.memory_space<vmem>>, vector<32x128xf32>
      %cst = arith.constant dense<0xFF800000> : vector<32xf32>
      %21 = vector.multi_reduction <maximumf>, %20, %cst [1] : vector<32x128xf32> to vector<32xf32>
      %22 = vector.shape_cast %21 : vector<32xf32> to vector<32x1xf32>
      %c0_15 = arith.constant 0 : index
      %c0_16 = arith.constant 0 : index
      %23 = vector.load %arg7[%c0_15, %c0_16] : memref<32x128xf32, #tpu.memory_space<vmem>>, vector<32x128xf32>
      %cst_17 = arith.constant dense<0.000000e+00> : vector<32xf32>
      %24 = vector.multi_reduction <add>, %23, %cst_17 [1] : vector<32x128xf32> to vector<32xf32>
      %25 = vector.shape_cast %24 : vector<32xf32> to vector<32x1xf32>
      %cst_18 = arith.constant 2.560000e+02 : f32
      %26 = vector.broadcast %cst_18 : f32 to vector<32x1xf32>
      %27 = arith.divf %25, %26 : vector<32x1xf32>
      %c0_19 = arith.constant 0 : index
      %c0_20 = arith.constant 0 : index
      %28 = vector.load %arg3[%c0_19, %c0_20] : memref<32x4xf32, #tpu.memory_space<vmem>>, vector<32x4xf32>
      %29 = vector.broadcast %22 : vector<32x1xf32> to vector<32x4xf32>
      %30 = arith.mulf %28, %29 : vector<32x4xf32>
      %cst_21 = arith.constant dense<0.000000e+00> : vector<4xf32>
      %31 = vector.multi_reduction <add>, %30, %cst_21 [0] : vector<32x4xf32> to vector<4xf32>
      %32 = vector.shape_cast %31 : vector<4xf32> to vector<1x4xf32>
      %33 = vector.broadcast %27 : vector<32x1xf32> to vector<32x4xf32>
      %34 = arith.mulf %28, %33 : vector<32x4xf32>
      %cst_22 = arith.constant dense<0.000000e+00> : vector<4xf32>
      %35 = vector.multi_reduction <add>, %34, %cst_22 [0] : vector<32x4xf32> to vector<4xf32>
      %36 = vector.shape_cast %35 : vector<4xf32> to vector<1x4xf32>
      %cst_23 = arith.constant 0.000000e+00 : f32
      %37 = vector.broadcast %cst_23 : f32 to vector<1x4xf32>
      %38 = arith.maximumf %32, %37 : vector<1x4xf32>
      %cst_24 = arith.constant 0.000000e+00 : f32
      %39 = vector.broadcast %cst_24 : f32 to vector<1x4xf32>
      %40 = arith.maximumf %36, %39 : vector<1x4xf32>
      %41 = arith.addf %38, %40 : vector<1x4xf32>
      %c0_25 = arith.constant 0 : index
      %c0_26 = arith.constant 0 : index
      %42 = vector.load %arg4[%c0_25, %c0_26] : memref<32x4xf32, #tpu.memory_space<vmem>>, vector<32x4xf32>
      %43 = vector.broadcast %41 : vector<1x4xf32> to vector<32x4xf32>
      %44 = arith.mulf %42, %43 : vector<32x4xf32>
      %cst_27 = arith.constant dense<0.000000e+00> : vector<32xf32>
      %45 = vector.multi_reduction <add>, %44, %cst_27 [1] : vector<32x4xf32> to vector<32xf32>
      %46 = vector.shape_cast %45 : vector<32xf32> to vector<32x1xf32>
      %cst_28 = arith.constant 0.000000e+00 : f32
      %47 = vector.broadcast %cst_28 : f32 to vector<32x1xf32>
      %48 = arith.subf %47, %46 : vector<32x1xf32>
      %49 = math.exp %48 : vector<32x1xf32>
      %cst_29 = arith.constant 1.000000e+00 : f32
      %50 = vector.broadcast %cst_29 : f32 to vector<32x1xf32>
      %51 = arith.addf %50, %49 : vector<32x1xf32>
      %cst_30 = arith.constant 1.000000e+00 : f32
      %52 = vector.broadcast %cst_30 : f32 to vector<32x1xf32>
      %53 = arith.divf %52, %51 : vector<32x1xf32>
      %c0_31 = arith.constant 0 : index
      %c0_32 = arith.constant 0 : index
      %c0_33 = arith.constant 0 : index
      %54 = vector.load %arg5[%c0_31, %c0_32, %c0_33] : memref<1x32x1xf32, #tpu.memory_space<vmem>>, vector<1x32x1xf32>
      %55 = vector.shape_cast %54 : vector<1x32x1xf32> to vector<32x1xf32>
      %56 = vector.shape_cast %53 : vector<32x1xf32> to vector<1x32x1xf32>
      tpu.vector_store %arg5[%c0_31, %c0_32, %c0_33], %56 {strides = array<i32>} : memref<1x32x1xf32, #tpu.memory_space<vmem>>, vector<1x32x1xf32>,
    } else {
    }
    return
  }
  func.func @transform_0(%arg0: i32, %arg1: i32) -> (i32, i32, i32) {
    %c0_i32 = arith.constant 0 : i32
    %c0_i32_0 = arith.constant 0 : i32
    return %arg0, %c0_i32, %arg1 : i32, i32, i32
  }
  func.func @transform_1(%arg0: i32, %arg1: i32) -> (i32, i32) {
    %c0_i32 = arith.constant 0 : i32
    %c0_i32_0 = arith.constant 0 : i32
    %c0_i32_1 = arith.constant 0 : i32
    return %c0_i32, %c0_i32_0 : i32, i32
  }
  func.func @transform_2(%arg0: i32, %arg1: i32) -> (i32, i32) {
    %c0_i32 = arith.constant 0 : i32
    %c0_i32_0 = arith.constant 0 : i32
    %c0_i32_1 = arith.constant 0 : i32
    return %c0_i32, %c0_i32_0 : i32, i32
  }
  func.func @transform_3(%arg0: i32, %arg1: i32) -> (i32, i32, i32) {
    %c0_i32 = arith.constant 0 : i32
    %c0_i32_0 = arith.constant 0 : i32
    %c0_i32_1 = arith.constant 0 : i32
    return %arg0, %c0_i32, %c0_i32_0 : i32, i32, i32
  }
}

</mosaic_0001>

<llo_original>
// kernel: channel_attention_forward.1
$region0: #{channel_attention_forward.1}
  #allocation0 [shape = 'u32[]', space=smem, size = 0x4, offset = 0x4, fixed_abs, tag = 'smem constant byte address 0x4 - core index']
  #allocation1 [shape = 'u32[144,128]{1,0:T(1,128)}', space=vmem, size = 0x12000, scoped, tag = 'internal scratch']
  #allocation2 [shape = 'f32[32,128]{1,0:T(8,128)}', space=vmem, size = 0x4000, scoped, tag = 'scratch operand']
  #allocation3 [shape = 'f32[32,128]{1,0:T(8,128)}', space=vmem, size = 0x4000, scoped, tag = 'scratch operand']
  %s0 = inlined_call_operand.vmem [shape: f32[2,32,256], index: 0, kind: input, shape index: {}]
  %s1 = inlined_call_operand.vmem [shape: f32[32,4], index: 1, kind: input, shape index: {}]
  %s2 = inlined_call_operand.vmem [shape: f32[32,4], index: 2, kind: input, shape index: {}]
  %s3 = inlined_call_operand.vmem [shape: f32[2,32,1], index: 3, kind: output, shape index: {}]
  %s4 = sld [smem:[#allocation0]]
  $region53: #{channel_attention_forward.1} parent=0
    _
  %s6 = ssub.s32 1, %s4
  %s7 = scalar_select 0, %s6, %s4
  loop: start=0, step=1, limit=4
  $region2: #{channel_attention_forward.1} parent=0 // loop_pre_header
    _
  $region3: #{channel_attention_forward.1} parent=0 // loop_header
    %s9 = sphi 0, %s13
    %p10 = scmp.ge.s32.totalorder %s9, 4
    %s16 = sphi 0, %s28
    %s17 = sphi 0, %s24
    %s18 = sphi 0, %s16
    %s19 = sphi 0, %s17
    %s20 = sphi 0, %s18
    %s21 = sphi 0, %s19
    %s33 = sphi 0, %s35
    %s36 = sphi 0, %s33
    %s37 = sphi 0, %s36
    %s53 = sphi 0, %s37
    %s57 = sphi 0, %s57
    %s59 = sphi 0, %s57
    %s60 = sphi 0, %s59
    %s74 = sphi 0, %s60
    %s78 = sphi 0, %s78
    %s80 = sphi 0, %s78
    %s81 = sphi 0, %s80
    %s95 = sphi 0, %s81
    %s101 = sphi 0, %s103
    %s104 = sphi 0, %s101
    %s105 = sphi 0, %s104
    %s121 = sphi 0, %s105
  $region4: #{channel_attention_forward.1} parent=0 // loop_header_branch
    %12 = sbr.rel (%p10) target = $region8
  $region5: #{channel_attention_forward.1} parent=0 // loop_body
    %s14 = ssub.s32 %s9, 1
    %s15 = ssub.s32 %s9, 2
    %s22 = sadd.s32 1, %s17
    %p23 = scmp.ge.s32.totalorder %s22, 1
    %s24 = scalar_select %p23, 0, %s22
    %s25 = sadd.s32 1, %s16
    %s26 = scalar_select %p23, %s25, %s16
    %p27 = scmp.ge.s32.totalorder %s26, 2
    %s28 = scalar_select %p27, 0, %s26
    %s29 = ssub.s32 %s16, %s28
    %s30 = ssub.s32 %s17, %s24
    %s31 = sor.u32 %s29, %s30
    %p32 = scmp.eq.s32.totalorder %s31, 0
    %s34 = sadd.s32 %s33, 1
    %s35 = scalar_select %p32, %s33, %s34
    %p38 = pneg %p32
    %p39 = scmp.eq.s32.totalorder %s9, 1
    %p40 = por %p38, %p39
    %p41 = scmp.ne.s32.totalorder %s33, %s36
    %p42 = scmp.eq.s32.totalorder %s9, 0
    %p43 = por %p41, %p42
    %p44 = scmp.ne.s32.totalorder %s33, %s36
    %p45 = scmp.eq.s32.totalorder %s14, 1
    %p46 = por %p44, %p45
    %p47 = scmp.ne.s32.totalorder %s36, %s37
    %p48 = scmp.eq.s32.totalorder %s14, 0
    %p49 = por %p47, %p48
    %p50 = scmp.ne.s32.totalorder %s36, %s37
    %p51 = scmp.eq.s32.totalorder %s15, 1
    %p52 = por %p50, %p51
    %p54 = scmp.ne.s32.totalorder %s37, %s53
    %p55 = scmp.eq.s32.totalorder %s15, 0
    %p56 = por %p54, %p55
    %s58 = sadd.s32 %s57, 1
    %p61 = scmp.eq.s32.totalorder %s9, 1
    %p62 = scmp.ne.s32.totalorder %s57, %s59
    %p63 = scmp.eq.s32.totalorder %s9, 0
    %p64 = por %p62, %p63
    %p65 = scmp.ne.s32.totalorder %s57, %s59
    %p66 = scmp.eq.s32.totalorder %s14, 1
    %p67 = por %p65, %p66
    %p68 = scmp.ne.s32.totalorder %s59, %s60
    %p69 = scmp.eq.s32.totalorder %s14, 0
    %p70 = por %p68, %p69
    %p71 = scmp.ne.s32.totalorder %s59, %s60
    %p72 = scmp.eq.s32.totalorder %s15, 1
    %p73 = por %p71, %p72
    %p75 = scmp.ne.s32.totalorder %s60, %s74
    %p76 = scmp.eq.s32.totalorder %s15, 0
    %p77 = por %p75, %p76
    %s79 = sadd.s32 %s78, 1
    %p82 = scmp.eq.s32.totalorder %s9, 1
    %p83 = scmp.ne.s32.totalorder %s78, %s80
    %p84 = scmp.eq.s32.totalorder %s9, 0
    %p85 = por %p83, %p84
    %p86 = scmp.ne.s32.totalorder %s78, %s80
    %p87 = scmp.eq.s32.totalorder %s14, 1
    %p88 = por %p86, %p87
    %p89 = scmp.ne.s32.totalorder %s80, %s81
    %p90 = scmp.eq.s32.totalorder %s14, 0
    %p91 = por %p89, %p90
    %p92 = scmp.ne.s32.totalorder %s80, %s81
    %p93 = scmp.eq.s32.totalorder %s15, 1
    %p94 = por %p92, %p93
    %p96 = scmp.ne.s32.totalorder %s81, %s95
    %p97 = scmp.eq.s32.totalorder %s15, 0
    %p98 = por %p96, %p97
    %s99 = ssub.s32 %s16, %s28
    %p100 = scmp.eq.s32.totalorder %s99, 0
    %s102 = sadd.s32 %s101, 1
    %s103 = scalar_select %p100, %s101, %s102
    %p106 = pneg %p100
    %p107 = scmp.eq.s32.totalorder %s9, 1
    %p108 = por %p106, %p107
    %p109 = scmp.ne.s32.totalorder %s101, %s104
    %p110 = scmp.eq.s32.totalorder %s9, 0
    %p111 = por %p109, %p110
    %p112 = scmp.ne.s32.totalorder %s101, %s104
    %p113 = scmp.eq.s32.totalorder %s14, 1
    %p114 = por %p112, %p113
    %p115 = scmp.ne.s32.totalorder %s104, %s105
    %p116 = scmp.eq.s32.totalorder %s14, 0
    %p117 = por %p115, %p116
    %p118 = scmp.ne.s32.totalorder %s104, %s105
    %p119 = scmp.eq.s32.totalorder %s15, 1
    %p120 = por %p118, %p119
    %p122 = scmp.ne.s32.totalorder %s105, %s121
    %p123 = scmp.eq.s32.totalorder %s15, 0
    %p124 = por %p122, %p123
    %p125 = scmp.le.s32.totalorder 1, %s9
    %p126 = scmp.lt.s32.totalorder %s9, 3
    %p127 = pnand %p125, %p126
    %p128 = pneg %p127
    // Predicated region
    $region9: #{channel_attention_forward.1} parent=5 // pred_check
      _
    $region10: #{channel_attention_forward.1} parent=5 // pred_check_branch
      %130 = sbr.rel (%p127) target = $region12
    $region11: #{channel_attention_forward.1} parent=5 // pred_region
      %s131 = ssub.s32 %s9, 1
      // Predicated region
      $region13: #{channel_attention_forward.1} parent=11 // pred_check
        %p132 = pneg %p70
      $region14: #{channel_attention_forward.1} parent=11 // pred_check_branch
        %134 = sbr.rel (%p132) target = $region16
      $region15: #{channel_attention_forward.1} parent=11 // pred_region
        _
      $region16: #{channel_attention_forward.1} parent=11 // pred_fallthru
        _
      // Predicated region
      $region17: #{channel_attention_forward.1} parent=11 // pred_check
        %p135 = pneg %p91
      $region18: #{channel_attention_forward.1} parent=11 // pred_check_branch
        %137 = sbr.rel (%p135) target = $region20
      $region19: #{channel_attention_forward.1} parent=11 // pred_region
        _
      $region20: #{channel_attention_forward.1} parent=11 // pred_fallthru
        _
    $region12: #{channel_attention_forward.1} parent=5 // pred_fallthru
      _
    %p138 = scmp.lt.s32.totalorder %s9, 2
    // Predicated region
    $region21: #{channel_attention_forward.1} parent=5 // pred_check
      %p139 = pneg %p138
    $region22: #{channel_attention_forward.1} parent=5 // pred_check_branch
      %141 = sbr.rel (%p139) target = $region24
    $region23: #{channel_attention_forward.1} parent=5 // pred_region
      // Predicated region
      $region25: #{channel_attention_forward.1} parent=23 // pred_check
        %p142 = pneg %p43
      $region26: #{channel_attention_forward.1} parent=23 // pred_check_branch
        %144 = sbr.rel (%p142) target = $region28
      $region27: #{channel_attention_forward.1} parent=23 // pred_region
        %s145 = smul.u32 2, %s17
        %p146 = scmp.lt.s32.totalorder %s16, 1
        %s147 = scalar_select %p146, %s16, 1
        %p148 = scmp.lt.s32.totalorder %s145, 1
        %s149 = scalar_select %p148, %s145, 1
        %s150 = smul.addr %s147, 8
        %s151 = sadd.s32 %s149, %s150
        %s152 = smul.addr %s151, 8
        %s153 = scalar_lea.vmem %s0, %s152
        %s154 = smul.u32 2, %s17
      $region28: #{channel_attention_forward.1} parent=23 // pred_fallthru
        _
    $region24: #{channel_attention_forward.1} parent=5 // pred_fallthru
      _
    %p155 = scmp.le.s32.totalorder 1, %s9
    %p156 = scmp.lt.s32.totalorder %s9, 3
    %p157 = pnand %p155, %p156
    %p158 = pneg %p157
    // Predicated region
    $region29: #{channel_attention_forward.1} parent=5 // pred_check
      _
    $region30: #{channel_attention_forward.1} parent=5 // pred_check_branch
      %160 = sbr.rel (%p157) target = $region32
    $region31: #{channel_attention_forward.1} parent=5 // pred_region
      %s161 = ssub.s32 %s9, 1
      %s162 = smul.u32 2, %s19
      %p163 = scmp.lt.s32.totalorder %s18, 1
      %s164 = scalar_select %p163, %s18, 1
      %p165 = scmp.lt.s32.totalorder %s162, 1
      %s166 = scalar_select %p165, %s162, 1
      %s167 = smul.addr %s164, 8
      %s168 = sadd.s32 %s166, %s167
      %s169 = smul.addr %s168, 8
      %s170 = scalar_lea.vmem %s0, %s169
      %p171 = pneg %p49
      %p172 = pneg %p46
      %p173 = pneg %p70
      %p174 = pneg %p67
      %p175 = pneg %p91
      %p176 = pneg %p88
      %p177 = pneg %p117
      %p178 = pneg %p114
      %p179 = scmp.lt.s32.totalorder %s18, 1
      %s180 = scalar_select %p179, %s18, 1
      %s181 = smul.addr %s180, 4
      %s182 = smul.addr %s181, 8
      %s183 = scalar_lea.vmem %s3, %s182
      %s184 = smul.u32 2, %s19
      %p185 = scmp.lt.s32.totalorder %s18, 1
      %s186 = scalar_select %p185, %s18, 1
      %p187 = scmp.lt.s32.totalorder %s184, 1
      %s188 = scalar_select %p187, %s184, 1
      %s189 = smul.addr %s186, 8
      %s190 = sadd.s32 %s188, %s189
      %s191 = smul.addr %s190, 8
      %s192 = scalar_lea.vmem %s0, %s191
      %s193 = smul.u32 2, %s19
      %p194 = scmp.lt.s32.totalorder %s18, 1
      %s195 = scalar_select %p194, %s18, 1
      %s196 = smul.addr %s195, 4
      %s197 = smul.addr %s196, 8
      %s198 = scalar_lea.vmem %s3, %s197
      %p199 = scmp.eq.s32.totalorder %s19, 0
      // Predicated region
      $region33: #{channel_attention_forward.1} parent=31 // pred_check
        %p200 = pneg %p199
      $region34: #{channel_attention_forward.1} parent=31 // pred_check_branch
        %202 = sbr.rel (%p200) target = $region36
      $region35: #{channel_attention_forward.1} parent=31 // pred_region
        %203 = vst [vmem:[#allocation2] sm:$0xff] -inf
        %204 = vst [vmem:[#allocation2 + $0x8] sm:$0xff] -inf
        %205 = vst [vmem:[#allocation2 + $0x10] sm:$0xff] -inf
        %206 = vst [vmem:[#allocation2 + $0x18] sm:$0xff] -inf
        %207 = vst [vmem:[#allocation3] sm:$0xff] 0.0
        %208 = vst [vmem:[#allocation3 + $0x8] sm:$0xff] 0.0
        %209 = vst [vmem:[#allocation3 + $0x10] sm:$0xff] 0.0
        %210 = vst [vmem:[#allocation3 + $0x18] sm:$0xff] 0.0
      $region36: #{channel_attention_forward.1} parent=31 // pred_fallthru
        _
      %v211 = vld [vmem:[%s192] sm:$0xff]
      %v212 = vld [vmem:[%s192 + $0x8] sm:$0xff]
      %v213 = vld [vmem:[%s192 + $0x10] sm:$0xff]
      %v214 = vld [vmem:[%s192 + $0x18] sm:$0xff]
      %v215 = vld [vmem:[%s192 + $0x20] sm:$0xff]
      %v216 = vld [vmem:[%s192 + $0x28] sm:$0xff]
      %v217 = vld [vmem:[%s192 + $0x30] sm:$0xff]
      %v218 = vld [vmem:[%s192 + $0x38] sm:$0xff]
      %v219 = vld [vmem:[#allocation2] sm:$0xff]
      %v220 = vld [vmem:[#allocation2 + $0x8] sm:$0xff]
      %v221 = vld [vmem:[#allocation2 + $0x10] sm:$0xff]
      %v222 = vld [vmem:[#allocation2 + $0x18] sm:$0xff]
      %v223 = vmax.f32 %v211, %v212
      %v224 = vmax.f32 %v213, %v214
      %v225 = vmax.f32 %v215, %v216
      %v226 = vmax.f32 %v217, %v218
      %v227 = vmax.f32 %v219, %v223
      %v228 = vmax.f32 %v220, %v224
      %v229 = vmax.f32 %v221, %v225
      %v230 = vmax.f32 %v222, %v226
      %231 = vst [vmem:[#allocation2] sm:$0xff] %v227
      %232 = vst [vmem:[#allocation2 + $0x8] sm:$0xff] %v228
      %233 = vst [vmem:[#allocation2 + $0x10] sm:$0xff] %v229
      %234 = vst [vmem:[#allocation2 + $0x18] sm:$0xff] %v230
      %v235 = vld [vmem:[#allocation3] sm:$0xff]
      %v236 = vld [vmem:[#allocation3 + $0x8] sm:$0xff]
      %v237 = vld [vmem:[#allocation3 + $0x10] sm:$0xff]
      %v238 = vld [vmem:[#allocation3 + $0x18] sm:$0xff]
      %v239 = vadd.f32 %v211, %v212
      %v240 = vadd.f32 %v213, %v214
      %v241 = vadd.f32 %v215, %v216
      %v242 = vadd.f32 %v217, %v218
      %v243 = vadd.f32 %v235, %v239
      %v244 = vadd.f32 %v236, %v240
      %v245 = vadd.f32 %v237, %v241
      %v246 = vadd.f32 %v238, %v242
      %247 = vst [vmem:[#allocation3] sm:$0xff] %v243
      %248 = vst [vmem:[#allocation3 + $0x8] sm:$0xff] %v244
      %249 = vst [vmem:[#allocation3 + $0x10] sm:$0xff] %v245
      %250 = vst [vmem:[#allocation3 + $0x18] sm:$0xff] %v246
      // Predicated region
      $region37: #{channel_attention_forward.1} parent=31 // pred_check
        %p251 = pneg %p199
      $region38: #{channel_attention_forward.1} parent=31 // pred_check_branch
        %253 = sbr.rel (%p251) target = $region40
      $region39: #{channel_attention_forward.1} parent=31 // pred_region
        %v254 = vld [vmem:[#allocation2] sm:$0xff]
        %v255 = vld [vmem:[#allocation2 + $0x8] sm:$0xff]
        %v256 = vld [vmem:[#allocation2 + $0x10] sm:$0xff]
        %v257 = vld [vmem:[#allocation2 + $0x18] sm:$0xff]
        %258 = vmax.xlane.f32.xlu0 %v254
        %v259 = vpop.xlane.xlu0 %258
        %260 = vmax.xlane.f32.xlu0 %v255
        %v261 = vpop.xlane.xlu0 %260
        %262 = vmax.xlane.f32.xlu0 %v256
        %v263 = vpop.xlane.xlu0 %262
        %264 = vmax.xlane.f32.xlu0 %v257
        %v265 = vpop.xlane.xlu0 %264
        %v266 = vld [vmem:[#allocation3] sm:$0xff]
        %v267 = vld [vmem:[#allocation3 + $0x8] sm:$0xff]
        %v268 = vld [vmem:[#allocation3 + $0x10] sm:$0xff]
        %v269 = vld [vmem:[#allocation3 + $0x18] sm:$0xff]
        %270 = vadd.xlane.f32.xlu0 %v266
        %v271 = vpop.xlane.xlu0 %270
        %272 = vadd.xlane.f32.xlu0 %v267
        %v273 = vpop.xlane.xlu0 %272
        %274 = vadd.xlane.f32.xlu0 %v268
        %v275 = vpop.xlane.xlu0 %274
        %276 = vadd.xlane.f32.xlu0 %v269
        %v277 = vpop.xlane.xlu0 %276
        %v278 = vrcp.pop 256.0
        %v279 = vmul.f32 %v271, %v278
        %v280 = vmul.f32 %v273, %v278
        %v281 = vmul.f32 %v275, %v278
        %v282 = vmul.f32 %v277, %v278
        %v283 = vld [vmem:[%s1] sm:$0xff]
        %v284 = vld [vmem:[%s1 + $0x8] sm:$0xff]
        %v285 = vld [vmem:[%s1 + $0x10] sm:$0xff]
        %v286 = vld [vmem:[%s1 + $0x18] sm:$0xff]
        %v287 = vmul.f32 %v283, %v259
        %v288 = vmul.f32 %v284, %v261
        %v289 = vmul.f32 %v285, %v263
        %v290 = vmul.f32 %v286, %v265
        %vm291 = vcmask 31744
        %v292 = vsel %vm291, %v287, 0.0
        %v293 = vsel %vm291, %v288, 0.0
        %v294 = vadd.f32 %v292, %v293
        %v295 = vsel %vm291, %v289, 0.0
        %v296 = vadd.f32 %v294, %v295
        %v297 = vsel %vm291, %v290, 0.0
        %v298 = vadd.f32 %v296, %v297
        %v299 = vrot.slane %v298, 4
        %v300 = vadd.f32 %v298, %v299
        %v301 = vrot.slane %v300, 2
        %v302 = vadd.f32 %v300, %v301
        %v303 = vrot.slane %v302, 1
        %v304 = vadd.f32 %v302, %v303
        %v305 = vmul.f32 %v283, %v279
        %v306 = vmul.f32 %v284, %v280
        %v307 = vmul.f32 %v285, %v281
        %v308 = vmul.f32 %v286, %v282
        %v309 = vsel %vm291, %v305, 0.0
        %v310 = vsel %vm291, %v306, 0.0
        %v311 = vadd.f32 %v309, %v310
        %v312 = vsel %vm291, %v307, 0.0
        %v313 = vadd.f32 %v311, %v312
        %v314 = vsel %vm291, %v308, 0.0
        %v315 = vadd.f32 %v313, %v314
        %v316 = vrot.slane %v315, 4
        %v317 = vadd.f32 %v315, %v316
        %v318 = vrot.slane %v317, 2
        %v319 = vadd.f32 %v317, %v318
        %v320 = vrot.slane %v319, 1
        %v321 = vadd.f32 %v319, %v320
        %v322 = vmax.f32 %v304, 0.0
        %v323 = vmax.f32 %v321, 0.0
        %v324 = vadd.f32 %v322, %v323
        %v325 = vld [vmem:[%s2] sm:$0xff]
        %v326 = vld [vmem:[%s2 + $0x8] sm:$0xff]
        %v327 = vld [vmem:[%s2 + $0x10] sm:$0xff]
        %v328 = vld [vmem:[%s2 + $0x18] sm:$0xff]
        %v329 = vmul.f32 %v325, %v324
        %v330 = vmul.f32 %v326, %v324
        %v331 = vmul.f32 %v327, %v324
        %v332 = vmul.f32 %v328, %v324
        %v333 = vsel %vm291, %v329, 0.0
        %334 = vadd.xlane.f32.xlu0 %v333
        %v335 = vpop.xlane.xlu0 %334
        %v336 = vsel %vm291, %v330, 0.0
        %337 = vadd.xlane.f32.xlu0 %v336
        %v338 = vpop.xlane.xlu0 %337
        %v339 = vsel %vm291, %v331, 0.0
        %340 = vadd.xlane.f32.xlu0 %v339
        %v341 = vpop.xlane.xlu0 %340
        %v342 = vsel %vm291, %v332, 0.0
        %343 = vadd.xlane.f32.xlu0 %v342
        %v344 = vpop.xlane.xlu0 %343
        %v345 = vsub.f32 0.0, %v335
        %v346 = vsub.f32 0.0, %v338
        %v347 = vsub.f32 0.0, %v341
        %v348 = vsub.f32 0.0, %v344
        %v349 = vmul.f32 %v345, 1.442695
        %v350 = vpow.pop %v349
        %v351 = vmul.f32 %v346, 1.442695
        %v352 = vpow.pop %v351
        %v353 = vmul.f32 %v347, 1.442695
        %v354 = vpow.pop %v353
        %v355 = vmul.f32 %v348, 1.442695
        %v356 = vpow.pop %v355
        %v357 = vadd.f32 %v350, 1.0
        %v358 = vadd.f32 %v352, 1.0
        %v359 = vadd.f32 %v354, 1.0
        %v360 = vadd.f32 %v356, 1.0
        %v361 = vrcp.pop %v357
        %v362 = vmul.f32 1.0, %v361
        %v363 = vrcp.pop %v358
        %v364 = vmul.f32 1.0, %v363
        %v365 = vrcp.pop %v359
        %v366 = vmul.f32 1.0, %v365
        %v367 = vrcp.pop %v360
        %v368 = vmul.f32 1.0, %v367
        %vm369 = vcmask 7168
        %370 = vst.msk [vmem:[%s198] sm:$0xff] %vm369, %v362
        %371 = vst.msk [vmem:[%s198 + $0x8] sm:$0xff] %vm369, %v364
        %372 = vst.msk [vmem:[%s198 + $0x10] sm:$0xff] %vm369, %v366
        %373 = vst.msk [vmem:[%s198 + $0x18] sm:$0xff] %vm369, %v368
      $region40: #{channel_attention_forward.1} parent=31 // pred_fallthru
        _
      %p374 = scmp.lt.s32.totalorder %s18, 1
      %s375 = scalar_select %p374, %s18, 1
      %s376 = smul.addr %s375, 4
      %s377 = smul.addr %s376, 8
      %s378 = scalar_lea.vmem %s3, %s377
      // Predicated region
      $region41: #{channel_attention_forward.1} parent=31 // pred_check
        %p379 = pneg %p114
      $region42: #{channel_attention_forward.1} parent=31 // pred_check_branch
        %381 = sbr.rel (%p379) target = $region44
      $region43: #{channel_attention_forward.1} parent=31 // pred_region
        _
      $region44: #{channel_attention_forward.1} parent=31 // pred_fallthru
        _
    $region32: #{channel_attention_forward.1} parent=5 // pred_fallthru
      _
    %p382 = scmp.le.s32.totalorder 2, %s9
    // Predicated region
    $region45: #{channel_attention_forward.1} parent=5 // pred_check
      %p383 = pneg %p382
    $region46: #{channel_attention_forward.1} parent=5 // pred_check_branch
      %385 = sbr.rel (%p383) target = $region48
    $region47: #{channel_attention_forward.1} parent=5 // pred_region
      %s386 = ssub.s32 %s9, 2
      // Predicated region
      $region49: #{channel_attention_forward.1} parent=47 // pred_check
        %p387 = pneg %p120
      $region50: #{channel_attention_forward.1} parent=47 // pred_check_branch
        %389 = sbr.rel (%p387) target = $region52
      $region51: #{channel_attention_forward.1} parent=47 // pred_region
        %p390 = scmp.lt.s32.totalorder %s20, 1
        %s391 = scalar_select %p390, %s20, 1
        %s392 = smul.addr %s391, 4
        %s393 = smul.addr %s392, 8
        %s394 = scalar_lea.vmem %s3, %s393
      $region52: #{channel_attention_forward.1} parent=47 // pred_fallthru
        _
    $region48: #{channel_attention_forward.1} parent=5 // pred_fallthru
      _
  $region6: #{channel_attention_forward.1} parent=0 // loop_footer
    %s13 = sadd.s32 1, %s9
  $region7: #{channel_attention_forward.1} parent=0 // loop_footer_branch
    %8 = sbr.rel target = $region3
  $region8: #{channel_attention_forward.1} parent=0 // loop_exit
    _

</llo_original>
